<compile_context>
chip_gen: v5e
topology: v5e:2x2
jax: 0.10.0
libtpu: 0.0.40
codegen_flags: <defaults>
</compile_context>

<pallas_src>
import functools

import jax
import jax.numpy as jnp
from jax import lax
from jax.experimental import pallas as pl
from jax.experimental.pallas import tpu as pltpu

EPS = 1e-5


# ---------------------------------------------------------------------------
# Fused kernel: one grid step = B images.
#   x_ref    : (s*s*C, B*Ppix)    space-to-depth input (phase*channel rows on sublanes,
#                                 flattened per-image pixels on lanes, lane-padded to 128x)
#   w_ref    : (G*hidden, s*s*C)  folded conv weights; one (hidden, s*s*C) slab per
#                                 tap-offset group g = (kh//s)*Q + kw//s
#   bias_ref : (hidden, B*Ppix)   precomputed bias map b1 + conv_{w1,s}(c*mask), tiled
#   o_ref    : (hidden, B*Ppix)   lane-dense output slab
# ---------------------------------------------------------------------------
def _conv_group_kernel(x_ref, w_ref, bias_ref, o_ref, *, group_shifts, n_hidden):
    x = x_ref[...]
    # One MXU matmul for all groups (M = G*hidden), f32 accumulation.
    full = jnp.dot(w_ref[...], x, preferred_element_type=jnp.float32)
    acc = bias_ref[...].astype(jnp.float32)
    for g, shift in enumerate(group_shifts):
        part = full[g * n_hidden:(g + 1) * n_hidden, :]
        if shift:
            # Output column (ho, wo) needs this group's partial at column
            # (ho + kh//s, wo + kw//s); static lane shift.  Columns that would cross an
            # image boundary land only in the over-computed (discarded) lanes.
            part = jnp.roll(part, -shift, axis=1)
        acc = acc + part
    o_ref[...] = acc.astype(o_ref.dtype)


def _pick_batch_block(n, per_image_bytes, vmem_target=1 << 20, min_steps=8):
    """Largest divisor of n whose block stays under ~1 MiB, preferring >= min_steps steps
    (so each v7x TensorCore gets several steps to pipeline)."""
    divisors = [d for d in range(1, n + 1) if n % d == 0]
    fitting = [d for d in divisors if d * per_image_bytes <= vmem_target] or [1]
    best = max(fitting)
    for d in sorted(fitting, reverse=True):
        if n // d >= min_steps:
            best = d
            break
    return best


def convolution_node_forward(x, params, *, kernel_size, stride, padding, mxu_dtype=None):
    """Pallas implementation of ConvolutionNode.forward on an NCHW input."""
    N, C, H, W = x.shape
    K, s, p = kernel_size, stride, padding
    Ho = (H + 2 * p - K) // s + 1
    Wo = (W + 2 * p - K) // s + 1
    hidden = params["w1"].shape[0]

    xf = x.astype(jnp.float32)

    # ---- BN batch statistics (training mode, biased variance); plain jnp reduction in the
    #      wrapper per perf review.  Mean subtracted before squaring (no cancellation).
    mean = jnp.mean(xf, axis=(0, 2, 3))                                        # (C,)
    var = jnp.mean(jnp.square(xf - mean.reshape(1, C, 1, 1)), axis=(0, 2, 3))  # (C,)

    # ---- fold BN + residual 1x1 conv into a per-pixel channel affine  y = A x + c
    a = params["bn_gamma"].astype(jnp.float32) * lax.rsqrt(var + EPS)          # (C,)
    b = params["bn_beta"].astype(jnp.float32) - mean * a                       # (C,)
    ipw2 = jnp.eye(C, dtype=jnp.float32) + params["w2"].reshape(C, C)          # I + w2
    A = ipw2 * a[None, :]                                                      # (C, C)
    cvec = ipw2 @ b + params["b2"].astype(jnp.float32)                         # (C,)

    # ---- fold the affine into the KxK conv weights
    w1 = params["w1"].astype(jnp.float32)                                      # (hid, C, K, K)
    w_fold = jnp.einsum('ocij,cd->odij', w1, A)                                # (hid, C, K, K)

    # ---- geometry of the phase (space-to-depth) decomposition of the strided conv
    Q = (K - 1) // s + 1                     # distinct tap offsets kh//s, kw//s
    G = Q * Q                                # weight groups
    Hh, Wh = Ho + Q - 1, Wo + Q - 1          # per-phase image size
    Hp, Wp = s * Hh, s * Wh                  # padded canvas actually read by the conv
    npix = Hh * Wh
    Ppix = -(-npix // 128) * 128             # per-image lane slab, multiple of 128

    # ---- spatially varying bias  b1 + conv_{w1,s}(c * mask)  (constant, tiny)
    ii = jnp.arange(Hp)
    jj = jnp.arange(Wp)
    mask = (((ii >= p) & (ii < p + H))[:, None] &
            ((jj >= p) & (jj < p + W))[None, :]).astype(jnp.float32)           # (Hp, Wp)
    mtaps = jnp.stack(
        [jnp.stack([mask[kh:kh + s * Ho:s, kw:kw + s * Wo:s] for kw in range(K)], 0)
         for kh in range(K)], 0)                                               # (K, K, Ho, Wo)
    biasmap = (params["b1"].astype(jnp.float32)[:, None, None]
               + jnp.einsum('ocij,c,ijhw->ohw', w1, cvec, mtaps))              # (hid, Ho, Wo)
    bias_canvas = jnp.zeros((hidden, Hh, Wh), jnp.float32).at[:, :Ho, :Wo].set(biasmap)
    bias_flat = jnp.pad(bias_canvas.reshape(hidden, npix), ((0, 0), (0, Ppix - npix)))

    # ---- grouped weight matrix (G*hidden, s*s*C); column (kh%s * s + kw%s)*C + c matches
    #      the input row layout below.
    wg = jnp.zeros((G, hidden, s * s * C), jnp.float32)
    for kh in range(K):
        for kw in range(K):
            g = (kh // s) * Q + (kw // s)
            col = ((kh % s) * s + (kw % s)) * C
            wg = wg.at[g, :, col:col + C].set(w_fold[:, :, kh, kw])
    w_all = wg.reshape(G * hidden, s * s * C)
    group_shifts = tuple(qh * Wh + qw for qh in range(Q) for qw in range(Q))

    # ---- pad + space-to-depth layout of x (HBM layout plumbing, one XLA copy of x):
    #      xr[(rh*s + rw)*C + c, n*Ppix + h*Wh + w] = x_padded[n, c, s*h + rh, s*w + rw]
    pad_h, pad_w = Hp - H - p, Wp - W - p        # may be negative (crop of unread rows/cols)
    xp = jnp.pad(xf, ((0, 0), (0, 0),
                      (p, max(pad_h, 0)), (p, max(pad_w, 0))))[:, :, :Hp, :Wp]
    xr = xp.reshape(N, C, Hh, s, Wh, s).transpose(3, 5, 1, 0, 2, 4)            # (s,s,C,N,Hh,Wh)
    xr = xr.reshape(s * s * C, N, npix)
    xr = jnp.pad(xr, ((0, 0), (0, 0), (0, Ppix - npix))).reshape(s * s * C, N * Ppix)

    # Optional bf16 MXU operands (v6e/v7x): single-pass MXU + half the HBM traffic on the
    # rearranged x; keep f32 accumulation.  Relax tolerance to ~1e-2 if enabled.
    if mxu_dtype is not None:
        xr = xr.astype(mxu_dtype)
        w_all = w_all.astype(mxu_dtype)

    # ---- batch-block the grid: lane width B*Ppix is a multiple of 128, ~1 MiB per step
    itemsize = jnp.dtype(xr.dtype).itemsize
    per_image = (s * s * C) * Ppix * itemsize + hidden * Ppix * 4
    B = _pick_batch_block(N, per_image)
    L = B * Ppix
    bias_tile = jnp.tile(bias_flat, (1, B))                                    # (hidden, L)

    # Resident constants (w_all, bias_tile) are tiny, so default double-buffering costs
    # nothing even within v7x's 64 MiB VMEM.
    # TODO(synk): for per-image slabs exceeding ~1 MiB (very large H*W), additionally tile
    # the flattened pixel axis with a Wh-row halo instead of whole images per step.
    out_flat = pl.pallas_call(
        functools.partial(_conv_group_kernel, group_shifts=group_shifts, n_hidden=hidden),
        grid=(N // B,),
        in_specs=[
            pl.BlockSpec((s * s * C, L), lambda nb: (0, nb)),        # x slab (per step)
            pl.BlockSpec((G * hidden, s * s * C), lambda nb: (0, 0)),  # weights (resident)
            pl.BlockSpec((hidden, L), lambda nb: (0, 0)),            # bias    (resident)
        ],
        out_specs=pl.BlockSpec((hidden, L), lambda nb: (0, nb)),
        out_shape=jax.ShapeDtypeStruct((hidden, N * Ppix), jnp.float32),
        compiler_params=pltpu.CompilerParams(
            dimension_semantics=("parallel",),      # images independent -> 2 TCs on v7x
            vmem_limit_bytes=32 * 1024 * 1024),
    )(xr, w_all, bias_tile)

    # ---- drop over-computed columns (h >= Ho, w >= Wo, lane padding) and go to NCHW
    out = out_flat.reshape(hidden, N, Ppix)[:, :, :npix]
    out = out.reshape(hidden, N, Hh, Wh)[:, :, :Ho, :Wo]
    return out.transpose(1, 0, 2, 3)                                           # (N, hid, Ho, Wo)


if __name__ == "__main__":
    # Module config: ConvolutionNode(input_channel=4, hidden_channel=8,
    #                                kernel_size=3, stride=2, padding=1)
    N, C, H, W = 2, 4, 16, 16
    hidden, K, stride, padding = 8, 3, 2, 1

    key = jax.random.PRNGKey(0)
    k = jax.random.split(key, 7)
    x = jax.random.normal(k[0], (N, C, H, W), jnp.float32)
    params = {
        "bn_gamma": 1.0 + 0.1 * jax.random.normal(k[1], (C,), jnp.float32),
        "bn_beta": 0.1 * jax.random.normal(k[2], (C,), jnp.float32),
        "w2": 0.2 * jax.random.normal(k[3], (C, C, 1, 1), jnp.float32),
        "b2": 0.1 * jax.random.normal(k[4], (C,), jnp.float32),
        "w1": 0.2 * jax.random.normal(k[5], (hidden, C, K, K), jnp.float32),
        "b1": 0.1 * jax.random.normal(k[6], (hidden,), jnp.float32),
    }

    fwd = jax.jit(functools.partial(convolution_node_forward, kernel_size=K,
                                    stride=stride, padding=padding))
    out = jax.block_until_ready(fwd(x, params))

    # Pure-JAX reference (training-mode BN with batch statistics).
    mean = x.mean(axis=(0, 2, 3), keepdims=True)
    var = ((x - mean) ** 2).mean(axis=(0, 2, 3), keepdims=True)
    xbn = (params["bn_gamma"].reshape(1, C, 1, 1) * (x - mean)
           / jnp.sqrt(var + EPS) + params["bn_beta"].reshape(1, C, 1, 1))
    dn = ("NCHW", "OIHW", "NCHW")
    y_ref = xbn + (lax.conv_general_dilated(xbn, params["w2"], (1, 1), "VALID",
                                            dimension_numbers=dn,
                                            precision=lax.Precision.HIGHEST)
                   + params["b2"].reshape(1, C, 1, 1))
    out_ref = (lax.conv_general_dilated(y_ref, params["w1"], (stride, stride),
                                        [(padding, padding), (padding, padding)],
                                        dimension_numbers=dn,
                                        precision=lax.Precision.HIGHEST)
               + params["b1"].reshape(1, hidden, 1, 1))

    assert out.shape == out_ref.shape, (out.shape, out_ref.shape)
    max_err = float(jnp.abs(out - out_ref).max())
    assert jnp.allclose(out, out_ref, rtol=5e-4, atol=5e-4), max_err
    print("KERNEL_OK")
</pallas_src>

<mosaic_0001>
module attributes {stable_mosaic.version = 11 : i64} {
  func.func @_conv_group_kernel(%arg0: i32, %arg1: memref<16x256xf32, #tpu.memory_space<vmem>>, %arg2: memref<32x16xf32, #tpu.memory_space<vmem>>, %arg3: memref<8x256xf32, #tpu.memory_space<vmem>>, %arg4: memref<8x256xf32, #tpu.memory_space<vmem>>) attributes {dimension_semantics = [#tpu.dimension_semantics<parallel>], iteration_bounds = array<i64: 1>, scalar_prefetch = 0 : i64, scratch_operands = 0 : i64, tpu.core_type = #tpu.core_type<tc>, window_params = [{transform_indices = @transform_0, window_bounds = array<i64: 16, 256>}, {pipeline_mode = #tpu.pipeline_mode<synchronous>, transform_indices = @transform_1, window_bounds = array<i64: 32, 16>}, {pipeline_mode = #tpu.pipeline_mode<synchronous>, transform_indices = @transform_2, window_bounds = array<i64: 8, 256>}, {transform_indices = @transform_3, window_bounds = array<i64: 8, 256>}]} {
    %c0 = arith.constant 0 : index
    %c0_0 = arith.constant 0 : index
    %0 = vector.load %arg1[%c0, %c0_0] : memref<16x256xf32, #tpu.memory_space<vmem>>, vector<16x256xf32>
    %c0_1 = arith.constant 0 : index
    %c0_2 = arith.constant 0 : index
    %1 = vector.load %arg2[%c0_1, %c0_2] : memref<32x16xf32, #tpu.memory_space<vmem>>, vector<32x16xf32>
    %cst = arith.constant dense<0.000000e+00> : vector<32x256xf32>
    %2 = tpu.matmul %1, %0, %cst {dimension_numbers = #tpu.dot_dimension_numbers<[1], [0], [0], [1], [0, 0, 1, 1], [], []>} : vector<32x16xf32>, vector<16x256xf32>, vector<32x256xf32> -> vector<32x256xf32>
    %c0_3 = arith.constant 0 : index
    %c0_4 = arith.constant 0 : index
    %3 = vector.load %arg3[%c0_3, %c0_4] : memref<8x256xf32, #tpu.memory_space<vmem>>, vector<8x256xf32>
    %4 = vector.extract_strided_slice %2 {offsets = [0, 0], sizes = [8, 256], strides = [1, 1]} : vector<32x256xf32> to vector<8x256xf32>
    %5 = arith.addf %3, %4 : vector<8x256xf32>
    %6 = vector.extract_strided_slice %2 {offsets = [8, 0], sizes = [8, 256], strides = [1, 1]} : vector<32x256xf32> to vector<8x256xf32>
    %7 = vector.extract_strided_slice %6 {offsets = [0, 1], sizes = [8, 255], strides = [1, 1]} : vector<8x256xf32> to vector<8x255xf32>
    %8 = vector.extract_strided_slice %6 {offsets = [0, 0], sizes = [8, 1], strides = [1, 1]} : vector<8x256xf32> to vector<8x1xf32>
    %9 = tpu.concatenate %7, %8 in 1 : vector<8x255xf32>, vector<8x1xf32> -> vector<8x256xf32>
    %10 = arith.addf %5, %9 : vector<8x256xf32>
    %11 = vector.extract_strided_slice %2 {offsets = [16, 0], sizes = [8, 256], strides = [1, 1]} : vector<32x256xf32> to vector<8x256xf32>
    %12 = vector.extract_strided_slice %11 {offsets = [0, 9], sizes = [8, 247], strides = [1, 1]} : vector<8x256xf32> to vector<8x247xf32>
    %13 = vector.extract_strided_slice %11 {offsets = [0, 0], sizes = [8, 9], strides = [1, 1]} : vector<8x256xf32> to vector<8x9xf32>
    %14 = tpu.concatenate %12, %13 in 1 : vector<8x247xf32>, vector<8x9xf32> -> vector<8x256xf32>
    %15 = arith.addf %10, %14 : vector<8x256xf32>
    %16 = vector.extract_strided_slice %2 {offsets = [24, 0], sizes = [8, 256], strides = [1, 1]} : vector<32x256xf32> to vector<8x256xf32>
    %17 = vector.extract_strided_slice %16 {offsets = [0, 10], sizes = [8, 246], strides = [1, 1]} : vector<8x256xf32> to vector<8x246xf32>
    %18 = vector.extract_strided_slice %16 {offsets = [0, 0], sizes = [8, 10], strides = [1, 1]} : vector<8x256xf32> to vector<8x10xf32>
    %19 = tpu.concatenate %17, %18 in 1 : vector<8x246xf32>, vector<8x10xf32> -> vector<8x256xf32>
    %20 = arith.addf %15, %19 : vector<8x256xf32>
    %c0_5 = arith.constant 0 : index
    %c0_6 = arith.constant 0 : index
    %21 = vector.load %arg4[%c0_5, %c0_6] : memref<8x256xf32, #tpu.memory_space<vmem>>, vector<8x256xf32>
    tpu.vector_store %arg4[%c0_5, %c0_6], %20 {strides = array<i32>} : memref<8x256xf32, #tpu.memory_space<vmem>>, vector<8x256xf32>,
    return
  }
  func.func @transform_0(%arg0: i32) -> (i32, i32) {
    %c0_i32 = arith.constant 0 : i32
    %c0_i32_0 = arith.constant 0 : i32
    return %c0_i32, %arg0 : i32, i32
  }
  func.func @transform_1(%arg0: i32) -> (i32, i32) {
    %c0_i32 = arith.constant 0 : i32
    %c0_i32_0 = arith.constant 0 : i32
    %c0_i32_1 = arith.constant 0 : i32
    return %c0_i32, %c0_i32_0 : i32, i32
  }
  func.func @transform_2(%arg0: i32) -> (i32, i32) {
    %c0_i32 = arith.constant 0 : i32
    %c0_i32_0 = arith.constant 0 : i32
    %c0_i32_1 = arith.constant 0 : i32
    return %c0_i32, %c0_i32_0 : i32, i32
  }
  func.func @transform_3(%arg0: i32) -> (i32, i32) {
    %c0_i32 = arith.constant 0 : i32
    %c0_i32_0 = arith.constant 0 : i32
    return %c0_i32, %arg0 : i32, i32
  }
}

</mosaic_0001>

<llo_original>
// kernel: convolution_node_forward.1
$region0: #{convolution_node_forward.1}
  #allocation0 [shape = 'u32[]', space=smem, size = 0x4, offset = 0x4, fixed_abs, tag = 'smem constant byte address 0x4 - core index']
  #allocation1 [shape = 'u32[72,128]{1,0:T(1,128)}', space=vmem, size = 0x9000, scoped, tag = 'internal scratch']
  %s0 = inlined_call_operand.vmem [shape: f32[16,256], index: 0, kind: input, shape index: {}]
  %s1 = inlined_call_operand.vmem [shape: f32[32,16], index: 1, kind: input, shape index: {}]
  %s2 = inlined_call_operand.vmem [shape: f32[8,256], index: 2, kind: input, shape index: {}]
  %s3 = inlined_call_operand.vmem [shape: f32[8,256], index: 3, kind: output, shape index: {}]
  %s4 = sld [smem:[#allocation0]]
  $region22: #{convolution_node_forward.1} parent=0
    _
  %s6 = ssub.s32 1, %s4
  %s7 = scalar_select 0, %s6, %s4
  // Predicated region
  $region2: #{convolution_node_forward.1} parent=0 // pred_check
    _
  $region3: #{convolution_node_forward.1} parent=0 // pred_check_branch
    %9 = sbr.rel (0) target = $region5
  $region4: #{convolution_node_forward.1} parent=0 // pred_region
    _
  $region5: #{convolution_node_forward.1} parent=0 // pred_fallthru
    _
  // Predicated region
  $region6: #{convolution_node_forward.1} parent=0 // pred_check
    _
  $region7: #{convolution_node_forward.1} parent=0 // pred_check_branch
    %11 = sbr.rel (0) target = $region9
  $region8: #{convolution_node_forward.1} parent=0 // pred_region
    _
  $region9: #{convolution_node_forward.1} parent=0 // pred_fallthru
    _
  // Predicated region
  $region10: #{convolution_node_forward.1} parent=0 // pred_check
    _
  $region11: #{convolution_node_forward.1} parent=0 // pred_check_branch
    %13 = sbr.rel (0) target = $region13
  $region12: #{convolution_node_forward.1} parent=0 // pred_region
    _
  $region13: #{convolution_node_forward.1} parent=0 // pred_fallthru
    _
  %v14 = vld [vmem:[%s0] sm:$0xff]
  %v15 = vld [vmem:[%s0 + $0x8] sm:$0xff]
  %v16 = vld [vmem:[%s0 + $0x10] sm:$0xff]
  %v17 = vld [vmem:[%s0 + $0x18] sm:$0xff]
  %v18 = vld [vmem:[%s1] sm:$0xff]
  %v19 = vld [vmem:[%s1 + $0x8] sm:$0xff]
  %v20 = vld [vmem:[%s1 + $0x10] sm:$0xff]
  %v21 = vld [vmem:[%s1 + $0x18] sm:$0xff]
  %vm22 = vcmask 130048
  %v24 = vsel %vm22, %v18, 0
  %v27 = vsel %vm22, %v19, 0
  %v30 = vsel %vm22, %v20, 0
  %v33 = vsel %vm22, %v21, 0
  %35 = vmatpush.msra.mxu0 0.0
  %36 = vmatpush.msra.mxu0 0.0
  %37 = vmatpush.msra.mxu0 0.0
  %38 = vmatpush.msra.mxu0 0.0
  %39 = vmatpush.msra.mxu0 0.0
  %40 = vmatpush.msra.mxu0 0.0
  %41 = vmatpush.msra.mxu0 0.0
  %42 = vmatpush.msra.mxu0 0.0
  %43 = vmatpush.msra.mxu0 0.0
  %44 = vmatpush.msra.mxu0 0.0
  %45 = vmatpush.msra.mxu0 0.0
  %46 = vmatpush.msra.mxu0 0.0
  %47 = vmatpush.msra.mxu0 0.0
  %48 = vmatpush.msra.mxu0 0.0
  %49 = vmatpush.msra.mxu0 %v16
  %50 = vmatpush.msra.mxu0 %v14
  %51 = vmatmul.f32.gmra.mxu0 %v24
  %v52 = vpop.f32.mrf.mxu0
  %v53 = vadd.f32 0.0, %v52
  %54 = vmatmul.f32.gmra.mxu0 %v27
  %v55 = vpop.f32.mrf.mxu0
  %v56 = vadd.f32 0.0, %v55
  %57 = vmatmul.f32.gmra.mxu0 %v30
  %v58 = vpop.f32.mrf.mxu0
  %v59 = vadd.f32 0.0, %v58
  %60 = vmatmul.f32.gmra.mxu0 %v33
  %v61 = vpop.f32.mrf.mxu0
  %v62 = vadd.f32 0.0, %v61
  %63 = vdwg.mxu0
  %64 = vmatpush.msra.mxu0 0.0
  %65 = vmatpush.msra.mxu0 0.0
  %66 = vmatpush.msra.mxu0 0.0
  %67 = vmatpush.msra.mxu0 0.0
  %68 = vmatpush.msra.mxu0 0.0
  %69 = vmatpush.msra.mxu0 0.0
  %70 = vmatpush.msra.mxu0 0.0
  %71 = vmatpush.msra.mxu0 0.0
  %72 = vmatpush.msra.mxu0 0.0
  %73 = vmatpush.msra.mxu0 0.0
  %74 = vmatpush.msra.mxu0 0.0
  %75 = vmatpush.msra.mxu0 0.0
  %76 = vmatpush.msra.mxu0 0.0
  %77 = vmatpush.msra.mxu0 0.0
  %78 = vmatpush.msra.mxu0 %v17
  %79 = vmatpush.msra.mxu0 %v15
  %80 = vmatmul.f32.gmra.mxu0 %v24
  %v81 = vpop.f32.mrf.mxu0
  %v82 = vadd.f32 0.0, %v81
  %83 = vmatmul.f32.gmra.mxu0 %v27
  %v84 = vpop.f32.mrf.mxu0
  %v85 = vadd.f32 0.0, %v84
  %86 = vmatmul.f32.gmra.mxu0 %v30
  %v87 = vpop.f32.mrf.mxu0
  %v88 = vadd.f32 0.0, %v87
  %89 = vmatmul.f32.gmra.mxu0 %v33
  %v90 = vpop.f32.mrf.mxu0
  %v91 = vadd.f32 0.0, %v90
  %92 = vdwg.mxu0
  %v93 = vld [vmem:[%s2] sm:$0xff]
  %v94 = vld [vmem:[%s2 + $0x8] sm:$0xff]
  %v95 = vadd.f32 %v93, %v53
  %v96 = vadd.f32 %v94, %v82
  %99 = vrot.lane.b32.xlu0 %v56, 127
  %v100 = vpop.permute.xlu0 %99
  %101 = vrot.lane.b32.xlu0 %v85, 127
  %v102 = vpop.permute.xlu0 %101
  %vm103 = vcmask 1039360
  %v104 = vsel %vm103, %v100, %v102
  %v108 = vsel %vm103, %v102, %v100
  %v109 = vadd.f32 %v95, %v104
  %v110 = vadd.f32 %v96, %v108
  %113 = vrot.lane.b32.xlu0 %v59, 119
  %v114 = vpop.permute.xlu0 %113
  %115 = vrot.lane.b32.xlu0 %v88, 119
  %v116 = vpop.permute.xlu0 %115
  %vm117 = vcmask 973824
  %v118 = vsel %vm117, %v114, %v116
  %v122 = vsel %vm117, %v116, %v114
  %v123 = vadd.f32 %v109, %v118
  %v124 = vadd.f32 %v110, %v122
  %127 = vrot.lane.b32.xlu0 %v62, 118
  %v128 = vpop.permute.xlu0 %127
  %129 = vrot.lane.b32.xlu0 %v91, 118
  %v130 = vpop.permute.xlu0 %129
  %vm131 = vcmask 965632
  %v132 = vsel %vm131, %v128, %v130
  %v136 = vsel %vm131, %v130, %v128
  %v137 = vadd.f32 %v123, %v132
  %v138 = vadd.f32 %v124, %v136
  %139 = vst [vmem:[%s3] sm:$0xff] %v137
  %140 = vst [vmem:[%s3 + $0x8] sm:$0xff] %v138
  // Predicated region
  $region14: #{convolution_node_forward.1} parent=0 // pred_check
    _
  $region15: #{convolution_node_forward.1} parent=0 // pred_check_branch
    %142 = sbr.rel (0) target = $region17
  $region16: #{convolution_node_forward.1} parent=0 // pred_region
    _
  $region17: #{convolution_node_forward.1} parent=0 // pred_fallthru
    _
  // Predicated region
  $region18: #{convolution_node_forward.1} parent=0 // pred_check
    _
  $region19: #{convolution_node_forward.1} parent=0 // pred_check_branch
    %144 = sbr.rel (0) target = $region21
  $region20: #{convolution_node_forward.1} parent=0 // pred_region
    _
  $region21: #{convolution_node_forward.1} parent=0 // pred_fallthru
    _

</llo_original>
